<compile_context>
chip_gen: v7x
topology: tpu7x:2x2x1
jax: 0.10.0
libtpu: 0.0.40
codegen_flags: <defaults>
</compile_context>

<pallas_src>
import functools

import jax
import jax.numpy as jnp
from jax.experimental import pallas as pl
from jax.experimental.pallas import tpu as pltpu


# ----------------------------------------------------------------------------
# Fused Pallas kernel: scaled matmul + online softmax + KL ('batchmean')
# ----------------------------------------------------------------------------
def _fused_similarity_kl_kernel(
    lhs_ref,      # (2B, D)     stacked [student; teacher] features (native dtype)
    keys_ref,     # (tile_k, D) current key tile (queue / teacher rows)
    o_ref,        # (1,) SMEM   scalar KL result
    m_s, l_s,     # (B, 1) f32  student running max / denom (log-sum-exp)
    m_t, l_t,     # (B, 1) f32  teacher running max / denom
    u_acc,        # (B, 1) f32  running sum_k exp(t_k - m_t) * (t_k - s_k)
    *,
    inv_temp, batch, num_keys, key_tile,
):
    k = pl.program_id(0)
    nk = pl.num_programs(0)

    @pl.when(k == 0)
    def _init():
        o_ref[0] = 0.0
        m_s[...] = jnp.full_like(m_s, -jnp.inf)
        m_t[...] = jnp.full_like(m_t, -jnp.inf)
        l_s[...] = jnp.zeros_like(l_s)
        l_t[...] = jnp.zeros_like(l_t)
        u_acc[...] = jnp.zeros_like(u_acc)

    # (2B, tile_k) logits: contract last axes of both operands (no explicit
    # transpose), native-dtype inputs, f32 accumulation on the MXU.
    logits = jax.lax.dot_general(
        lhs_ref[...],
        keys_ref[...],
        dimension_numbers=(((1,), (1,)), ((), ())),
        preferred_element_type=jnp.float32,
    ) * inv_temp

    if num_keys % key_tile != 0:
        # Ragged last key tile: mask out-of-range key columns so they drop
        # out of the softmax / KL sums (handles undefined padded key rows).
        col = k * key_tile + jax.lax.broadcasted_iota(
            jnp.int32, (2 * batch, key_tile), 1)
        logits = jnp.where(col < num_keys, logits, -1e30)

    s = logits[:batch]    # student logits block (B, tile_k)
    t = logits[batch:]    # teacher logits block (B, tile_k)

    # --- online log-sum-exp for the student (for log_softmax) --------------
    m_s_new = jnp.maximum(m_s[...], jnp.max(s, axis=1, keepdims=True))
    l_s[...] = l_s[...] * jnp.exp(m_s[...] - m_s_new) + jnp.sum(
        jnp.exp(s - m_s_new), axis=1, keepdims=True)
    m_s[...] = m_s_new

    # --- online softmax stats + KL-weighted sum for the teacher ------------
    m_t_new = jnp.maximum(m_t[...], jnp.max(t, axis=1, keepdims=True))
    corr = jnp.exp(m_t[...] - m_t_new)
    p = jnp.exp(t - m_t_new)                        # un-normalized teacher probs
    l_t[...] = l_t[...] * corr + jnp.sum(p, axis=1, keepdims=True)
    u_acc[...] = u_acc[...] * corr + jnp.sum(p * (t - s), axis=1, keepdims=True)
    m_t[...] = m_t_new

    @pl.when(k == nk - 1)
    def _finalize():
        # KL row = E_t[t - s] - logZ_t + logZ_s
        inv_lt = pl.reciprocal(l_t[...], approx=False)
        kl_rows = (u_acc[...] * inv_lt
                   - (m_t[...] + jnp.log(l_t[...]))
                   + (m_s[...] + jnp.log(l_s[...])))
        o_ref[0] = jnp.sum(kl_rows) / jnp.float32(batch)   # 'batchmean'


def fused_similarity_kl(student_feature, teacher_feature, keys, temperature,
                        *, key_tile=512):
    """KL(softmax(teacher @ keys.T / T) || log_softmax(student @ keys.T / T)),
    reduction='batchmean', without materializing the (B, K) logits in HBM."""
    B, D = student_feature.shape
    assert teacher_feature.shape == (B, D)
    K, Dk = keys.shape
    assert Dk == D

    # Stack so the shared RHS (queue / teacher) is streamed from HBM once and
    # both matmuls share the resident key tile.
    lhs = jnp.concatenate([student_feature, teacher_feature], axis=0)  # (2B, D)

    # Key tile: whole K if it fits in one block, otherwise a multiple of 128.
    tile = min(K, max(128, (int(key_tile) // 128) * 128))
    grid_k = pl.cdiv(K, tile)

    kernel = functools.partial(
        _fused_similarity_kl_kernel,
        inv_temp=1.0 / float(temperature),
        batch=B, num_keys=K, key_tile=tile,
    )
    out = pl.pallas_call(
        kernel,
        out_shape=jax.ShapeDtypeStruct((1,), jnp.float32),
        grid_spec=pltpu.PrefetchScalarGridSpec(
            num_scalar_prefetch=0,
            grid=(grid_k,),
            in_specs=[
                pl.BlockSpec((2 * B, D), lambda k: (0, 0)),   # resident LHS
                pl.BlockSpec((tile, D), lambda k: (k, 0)),    # streamed key tiles
            ],
            out_specs=pl.BlockSpec(memory_space=pltpu.SMEM),
            scratch_shapes=[pltpu.VMEM((B, 1), jnp.float32)] * 5,
        ),
        compiler_params=pltpu.CompilerParams(
            dimension_semantics=("arbitrary",),      # key axis is a reduction
            vmem_limit_bytes=32 * 1024 * 1024,       # explicit, safe on v5e/v6e/v7x
        ),
    )(lhs, keys)
    return out[0]


# ----------------------------------------------------------------------------
# Module-level glue (mirrors the PyTorch KLD module)
# ----------------------------------------------------------------------------
class SIMILARITY:
    TEMPORAL = "temporal"
    INSTANCE = "instance"


class InstanceSimilarity:
    """Logits of each feature against a memory queue (MoCo-style)."""

    def get_keys(self, student_feature, teacher_feature, queue):
        return queue


class TemporalSimilarity:
    """Logits of student/teacher clips against the teacher batch."""

    def get_keys(self, student_feature, teacher_feature, queue):
        return teacher_feature


class KLD:
    def __init__(self, similarities, alpha: float, key_tile: int = 512):
        if alpha <= 0:
            raise ValueError(f"Alpha should be a positive number! Got {alpha} instead.")
        self.similarities = similarities
        self.coefficient = {
            SIMILARITY.TEMPORAL: 1.0 - alpha,
            SIMILARITY.INSTANCE: alpha,
        }
        self.key_tile = key_tile

    def _get_similarity_loss(self, student_feature, teacher_feature, temperature, queue):
        # TODO(synk): on v7x (2 TensorCores) a further win is a batch-parallel
        # ('parallel', 'arbitrary') grid or fusing both similarity terms into
        # one call; kept as two fused calls + a scalar combine for clarity.
        loss = 0.0
        for name, similarity in self.similarities.items():
            keys = similarity.get_keys(student_feature, teacher_feature, queue)
            kl = fused_similarity_kl(
                student_feature, teacher_feature, keys, temperature,
                key_tile=self.key_tile,
            )
            loss = loss + self.coefficient[name] * kl
        return loss

    def forward(self, student_feature, teacher_feature, temperature, queue):
        return self._get_similarity_loss(
            student_feature, teacher_feature, temperature, queue
        )

    __call__ = forward


# ----------------------------------------------------------------------------
# Pure-JAX reference for correctness checking
# ----------------------------------------------------------------------------
def _ref_kl(s_logits, t_logits):
    s_logp = jax.nn.log_softmax(s_logits, axis=1)
    t_p = jax.nn.softmax(t_logits, axis=1)
    return jnp.sum(t_p * (jnp.log(t_p) - s_logp)) / s_logits.shape[0]


def _ref_loss(student, teacher, temperature, queue, alpha):
    inv_t = 1.0 / temperature
    s_tmp = student @ teacher.T * inv_t
    t_tmp = teacher @ teacher.T * inv_t
    s_ins = student @ queue.T * inv_t
    t_ins = teacher @ queue.T * inv_t
    return (1.0 - alpha) * _ref_kl(s_tmp, t_tmp) + alpha * _ref_kl(s_ins, t_ins)


if __name__ == "__main__":
    key = jax.random.PRNGKey(0)
    k1, k2, k3 = jax.random.split(key, 3)

    # small shapes; Q is deliberately NOT a multiple of the key tile so the
    # multi-tile online-softmax path AND the ragged-tile masking are exercised.
    B, D, Q = 8, 128, 320
    temperature = 0.07
    alpha = 0.5

    def l2norm(x):
        return x / jnp.linalg.norm(x, axis=1, keepdims=True)

    student = l2norm(jax.random.normal(k1, (B, D), dtype=jnp.float32))
    teacher = l2norm(jax.random.normal(k2, (B, D), dtype=jnp.float32))
    queue = l2norm(jax.random.normal(k3, (Q, D), dtype=jnp.float32))

    kld = KLD(
        similarities={
            SIMILARITY.TEMPORAL: TemporalSimilarity(),
            SIMILARITY.INSTANCE: InstanceSimilarity(),
        },
        alpha=alpha,
        key_tile=128,   # small tile so the demo runs >1 grid step over the queue
    )

    loss = kld(student, teacher, temperature, queue)
    loss = jax.block_until_ready(loss)

    ref = _ref_loss(student, teacher, temperature, queue, alpha)
    assert jnp.allclose(loss, ref, rtol=1e-4, atol=1e-5), (loss, ref)

    print("KERNEL_OK")
</pallas_src>

<mosaic_0001>
module attributes {stable_mosaic.version = 11 : i64} {
  func.func @_fused_similarity_kl_kernel(%arg0: i32, %arg1: memref<16x128xf32, #tpu.memory_space<vmem>>, %arg2: memref<8x128xf32, #tpu.memory_space<vmem>>, %arg3: memref<1xf32, #tpu.memory_space<smem>>, %arg4: memref<8x1xf32, #tpu.memory_space<vmem>>, %arg5: memref<8x1xf32, #tpu.memory_space<vmem>>, %arg6: memref<8x1xf32, #tpu.memory_space<vmem>>, %arg7: memref<8x1xf32, #tpu.memory_space<vmem>>, %arg8: memref<8x1xf32, #tpu.memory_space<vmem>>) attributes {dimension_semantics = [#tpu.dimension_semantics<arbitrary>], iteration_bounds = array<i64: 1>, scalar_prefetch = 0 : i64, scratch_operands = 5 : i64, tpu.core_type = #tpu.core_type<tc>, window_params = [{pipeline_mode = #tpu.pipeline_mode<synchronous>, transform_indices = @transform_0, window_bounds = array<i64: 16, 128>}, {transform_indices = @transform_1, window_bounds = array<i64: 8, 128>}, {transform_indices = @transform_2, window_bounds = array<i64: 1>}]} {
    %c0_i32 = arith.constant 0 : i32
    %0 = arith.cmpi eq, %arg0, %c0_i32 : i32
    %1 = arith.extui %0 : i1 to i32
    %c0_i32_0 = arith.constant 0 : i32
    %2 = arith.cmpi ne, %1, %c0_i32_0 : i32
    scf.if %2 {
      %cst_36 = arith.constant 0.000000e+00 : f32
      %c0_37 = arith.constant 0 : index
      %55 = memref.load %arg3[%c0_37] : memref<1xf32, #tpu.memory_space<smem>>
      memref.store %cst_36, %arg3[%c0_37] : memref<1xf32, #tpu.memory_space<smem>>
      %cst_38 = arith.constant 0xFF800000 : f32
      %56 = vector.broadcast %cst_38 : f32 to vector<8x1xf32>
      %c0_39 = arith.constant 0 : index
      %c0_40 = arith.constant 0 : index
      %57 = vector.load %arg4[%c0_39, %c0_40] : memref<8x1xf32, #tpu.memory_space<vmem>>, vector<8x1xf32>
      tpu.vector_store %arg4[%c0_39, %c0_40], %56 {strides = array<i32>} : memref<8x1xf32, #tpu.memory_space<vmem>>, vector<8x1xf32>,
      %cst_41 = arith.constant 0xFF800000 : f32
      %58 = vector.broadcast %cst_41 : f32 to vector<8x1xf32>
      %c0_42 = arith.constant 0 : index
      %c0_43 = arith.constant 0 : index
      %59 = vector.load %arg6[%c0_42, %c0_43] : memref<8x1xf32, #tpu.memory_space<vmem>>, vector<8x1xf32>
      tpu.vector_store %arg6[%c0_42, %c0_43], %58 {strides = array<i32>} : memref<8x1xf32, #tpu.memory_space<vmem>>, vector<8x1xf32>,
      %cst_44 = arith.constant 0.000000e+00 : f32
      %60 = vector.broadcast %cst_44 : f32 to vector<8x1xf32>
      %c0_45 = arith.constant 0 : index
      %c0_46 = arith.constant 0 : index
      %61 = vector.load %arg5[%c0_45, %c0_46] : memref<8x1xf32, #tpu.memory_space<vmem>>, vector<8x1xf32>
      tpu.vector_store %arg5[%c0_45, %c0_46], %60 {strides = array<i32>} : memref<8x1xf32, #tpu.memory_space<vmem>>, vector<8x1xf32>,
      %cst_47 = arith.constant 0.000000e+00 : f32
      %62 = vector.broadcast %cst_47 : f32 to vector<8x1xf32>
      %c0_48 = arith.constant 0 : index
      %c0_49 = arith.constant 0 : index
      %63 = vector.load %arg7[%c0_48, %c0_49] : memref<8x1xf32, #tpu.memory_space<vmem>>, vector<8x1xf32>
      tpu.vector_store %arg7[%c0_48, %c0_49], %62 {strides = array<i32>} : memref<8x1xf32, #tpu.memory_space<vmem>>, vector<8x1xf32>,
      %cst_50 = arith.constant 0.000000e+00 : f32
      %64 = vector.broadcast %cst_50 : f32 to vector<8x1xf32>
      %c0_51 = arith.constant 0 : index
      %c0_52 = arith.constant 0 : index
      %65 = vector.load %arg8[%c0_51, %c0_52] : memref<8x1xf32, #tpu.memory_space<vmem>>, vector<8x1xf32>
      tpu.vector_store %arg8[%c0_51, %c0_52], %64 {strides = array<i32>} : memref<8x1xf32, #tpu.memory_space<vmem>>, vector<8x1xf32>,
    } else {
    }
    %c0 = arith.constant 0 : index
    %c0_1 = arith.constant 0 : index
    %3 = vector.load %arg1[%c0, %c0_1] : memref<16x128xf32, #tpu.memory_space<vmem>>, vector<16x128xf32>
    %c0_2 = arith.constant 0 : index
    %c0_3 = arith.constant 0 : index
    %4 = vector.load %arg2[%c0_2, %c0_3] : memref<8x128xf32, #tpu.memory_space<vmem>>, vector<8x128xf32>
    %cst = arith.constant dense<0.000000e+00> : vector<16x8xf32>
    %5 = tpu.matmul %3, %4, %cst {dimension_numbers = #tpu.dot_dimension_numbers<[1], [1], [0], [0], [0, 0, 1, 0], [], []>} : vector<16x128xf32>, vector<8x128xf32>, vector<16x8xf32> -> vector<16x8xf32>
    %cst_4 = arith.constant 14.2857141 : f32
    %6 = vector.broadcast %cst_4 : f32 to vector<16x8xf32>
    %7 = arith.mulf %5, %6 : vector<16x8xf32>
    %8 = vector.extract_strided_slice %7 {offsets = [0, 0], sizes = [8, 8], strides = [1, 1]} : vector<16x8xf32> to vector<8x8xf32>
    %9 = vector.extract_strided_slice %7 {offsets = [8, 0], sizes = [8, 8], strides = [1, 1]} : vector<16x8xf32> to vector<8x8xf32>
    %c0_5 = arith.constant 0 : index
    %c0_6 = arith.constant 0 : index
    %10 = vector.load %arg4[%c0_5, %c0_6] : memref<8x1xf32, #tpu.memory_space<vmem>>, vector<8x1xf32>
    %cst_7 = arith.constant dense<0xFF800000> : vector<8xf32>
    %11 = vector.multi_reduction <maximumf>, %8, %cst_7 [1] : vector<8x8xf32> to vector<8xf32>
    %12 = vector.shape_cast %11 : vector<8xf32> to vector<8x1xf32>
    %13 = arith.maximumf %10, %12 : vector<8x1xf32>
    %c0_8 = arith.constant 0 : index
    %c0_9 = arith.constant 0 : index
    %14 = vector.load %arg5[%c0_8, %c0_9] : memref<8x1xf32, #tpu.memory_space<vmem>>, vector<8x1xf32>
    %c0_10 = arith.constant 0 : index
    %c0_11 = arith.constant 0 : index
    %15 = vector.load %arg4[%c0_10, %c0_11] : memref<8x1xf32, #tpu.memory_space<vmem>>, vector<8x1xf32>
    %16 = arith.subf %15, %13 : vector<8x1xf32>
    %17 = math.exp %16 : vector<8x1xf32>
    %18 = arith.mulf %14, %17 : vector<8x1xf32>
    %19 = vector.broadcast %13 : vector<8x1xf32> to vector<8x8xf32>
    %20 = arith.subf %8, %19 : vector<8x8xf32>
    %21 = math.exp %20 : vector<8x8xf32>
    %cst_12 = arith.constant dense<0.000000e+00> : vector<8xf32>
    %22 = vector.multi_reduction <add>, %21, %cst_12 [1] : vector<8x8xf32> to vector<8xf32>
    %23 = vector.shape_cast %22 : vector<8xf32> to vector<8x1xf32>
    %24 = arith.addf %18, %23 : vector<8x1xf32>
    %c0_13 = arith.constant 0 : index
    %c0_14 = arith.constant 0 : index
    %25 = vector.load %arg5[%c0_13, %c0_14] : memref<8x1xf32, #tpu.memory_space<vmem>>, vector<8x1xf32>
    tpu.vector_store %arg5[%c0_13, %c0_14], %24 {strides = array<i32>} : memref<8x1xf32, #tpu.memory_space<vmem>>, vector<8x1xf32>,
    %c0_15 = arith.constant 0 : index
    %c0_16 = arith.constant 0 : index
    %26 = vector.load %arg4[%c0_15, %c0_16] : memref<8x1xf32, #tpu.memory_space<vmem>>, vector<8x1xf32>
    tpu.vector_store %arg4[%c0_15, %c0_16], %13 {strides = array<i32>} : memref<8x1xf32, #tpu.memory_space<vmem>>, vector<8x1xf32>,
    %c0_17 = arith.constant 0 : index
    %c0_18 = arith.constant 0 : index
    %27 = vector.load %arg6[%c0_17, %c0_18] : memref<8x1xf32, #tpu.memory_space<vmem>>, vector<8x1xf32>
    %cst_19 = arith.constant dense<0xFF800000> : vector<8xf32>
    %28 = vector.multi_reduction <maximumf>, %9, %cst_19 [1] : vector<8x8xf32> to vector<8xf32>
    %29 = vector.shape_cast %28 : vector<8xf32> to vector<8x1xf32>
    %30 = arith.maximumf %27, %29 : vector<8x1xf32>
    %c0_20 = arith.constant 0 : index
    %c0_21 = arith.constant 0 : index
    %31 = vector.load %arg6[%c0_20, %c0_21] : memref<8x1xf32, #tpu.memory_space<vmem>>, vector<8x1xf32>
    %32 = arith.subf %31, %30 : vector<8x1xf32>
    %33 = math.exp %32 : vector<8x1xf32>
    %34 = vector.broadcast %30 : vector<8x1xf32> to vector<8x8xf32>
    %35 = arith.subf %9, %34 : vector<8x8xf32>
    %36 = math.exp %35 : vector<8x8xf32>
    %c0_22 = arith.constant 0 : index
    %c0_23 = arith.constant 0 : index
    %37 = vector.load %arg7[%c0_22, %c0_23] : memref<8x1xf32, #tpu.memory_space<vmem>>, vector<8x1xf32>
    %38 = arith.mulf %37, %33 : vector<8x1xf32>
    %cst_24 = arith.constant dense<0.000000e+00> : vector<8xf32>
    %39 = vector.multi_reduction <add>, %36, %cst_24 [1] : vector<8x8xf32> to vector<8xf32>
    %40 = vector.shape_cast %39 : vector<8xf32> to vector<8x1xf32>
    %41 = arith.addf %38, %40 : vector<8x1xf32>
    %c0_25 = arith.constant 0 : index
    %c0_26 = arith.constant 0 : index
    %42 = vector.load %arg7[%c0_25, %c0_26] : memref<8x1xf32, #tpu.memory_space<vmem>>, vector<8x1xf32>
    tpu.vector_store %arg7[%c0_25, %c0_26], %41 {strides = array<i32>} : memref<8x1xf32, #tpu.memory_space<vmem>>, vector<8x1xf32>,
    %c0_27 = arith.constant 0 : index
    %c0_28 = arith.constant 0 : index
    %43 = vector.load %arg8[%c0_27, %c0_28] : memref<8x1xf32, #tpu.memory_space<vmem>>, vector<8x1xf32>
    %44 = arith.mulf %43, %33 : vector<8x1xf32>
    %45 = arith.subf %9, %8 : vector<8x8xf32>
    %46 = arith.mulf %36, %45 : vector<8x8xf32>
    %cst_29 = arith.constant dense<0.000000e+00> : vector<8xf32>
    %47 = vector.multi_reduction <add>, %46, %cst_29 [1] : vector<8x8xf32> to vector<8xf32>
    %48 = vector.shape_cast %47 : vector<8xf32> to vector<8x1xf32>
    %49 = arith.addf %44, %48 : vector<8x1xf32>
    %c0_30 = arith.constant 0 : index
    %c0_31 = arith.constant 0 : index
    %50 = vector.load %arg8[%c0_30, %c0_31] : memref<8x1xf32, #tpu.memory_space<vmem>>, vector<8x1xf32>
    tpu.vector_store %arg8[%c0_30, %c0_31], %49 {strides = array<i32>} : memref<8x1xf32, #tpu.memory_space<vmem>>, vector<8x1xf32>,
    %c0_32 = arith.constant 0 : index
    %c0_33 = arith.constant 0 : index
    %51 = vector.load %arg6[%c0_32, %c0_33] : memref<8x1xf32, #tpu.memory_space<vmem>>, vector<8x1xf32>
    tpu.vector_store %arg6[%c0_32, %c0_33], %30 {strides = array<i32>} : memref<8x1xf32, #tpu.memory_space<vmem>>, vector<8x1xf32>,
    %c0_i32_34 = arith.constant 0 : i32
    %52 = arith.cmpi eq, %arg0, %c0_i32_34 : i32
    %53 = arith.extui %52 : i1 to i32
    %c0_i32_35 = arith.constant 0 : i32
    %54 = arith.cmpi ne, %53, %c0_i32_35 : i32
    scf.if %54 {
      %c0_36 = arith.constant 0 : index
      %c0_37 = arith.constant 0 : index
      %55 = vector.load %arg7[%c0_36, %c0_37] : memref<8x1xf32, #tpu.memory_space<vmem>>, vector<8x1xf32>
      %56 = tpu.reciprocal %55 : vector<8x1xf32> -> vector<8x1xf32>
      %c0_38 = arith.constant 0 : index
      %c0_39 = arith.constant 0 : index
      %57 = vector.load %arg8[%c0_38, %c0_39] : memref<8x1xf32, #tpu.memory_space<vmem>>, vector<8x1xf32>
      %58 = arith.mulf %57, %56 : vector<8x1xf32>
      %c0_40 = arith.constant 0 : index
      %c0_41 = arith.constant 0 : index
      %59 = vector.load %arg6[%c0_40, %c0_41] : memref<8x1xf32, #tpu.memory_space<vmem>>, vector<8x1xf32>
      %c0_42 = arith.constant 0 : index
      %c0_43 = arith.constant 0 : index
      %60 = vector.load %arg7[%c0_42, %c0_43] : memref<8x1xf32, #tpu.memory_space<vmem>>, vector<8x1xf32>
      %61 = math.log %60 : vector<8x1xf32>
      %62 = arith.addf %59, %61 : vector<8x1xf32>
      %63 = arith.subf %58, %62 : vector<8x1xf32>
      %c0_44 = arith.constant 0 : index
      %c0_45 = arith.constant 0 : index
      %64 = vector.load %arg4[%c0_44, %c0_45] : memref<8x1xf32, #tpu.memory_space<vmem>>, vector<8x1xf32>
      %c0_46 = arith.constant 0 : index
      %c0_47 = arith.constant 0 : index
      %65 = vector.load %arg5[%c0_46, %c0_47] : memref<8x1xf32, #tpu.memory_space<vmem>>, vector<8x1xf32>
      %66 = math.log %65 : vector<8x1xf32>
      %67 = arith.addf %64, %66 : vector<8x1xf32>
      %68 = arith.addf %63, %67 : vector<8x1xf32>
      %69 = vector.shape_cast %68 : vector<8x1xf32> to vector<1x8x1xf32>
      %cst_48 = arith.constant dense<0.000000e+00> : vector<1xf32>
      %70 = vector.multi_reduction <add>, %69, %cst_48 [1, 2] : vector<1x8x1xf32> to vector<1xf32>
      %71 = vector.shape_cast %70 : vector<1xf32> to vector<1x1x1xf32>
      %72 = vector.extract %71[0, 0, 0] : f32 from vector<1x1x1xf32>
      %cst_49 = arith.constant 8.000000e+00 : f32
      %73 = arith.divf %72, %cst_49 : f32
      %c0_50 = arith.constant 0 : index
      %74 = memref.load %arg3[%c0_50] : memref<1xf32, #tpu.memory_space<smem>>
      memref.store %73, %arg3[%c0_50] : memref<1xf32, #tpu.memory_space<smem>>
    } else {
    }
    return
  }
  func.func @transform_0(%arg0: i32) -> (i32, i32) {
    %c0_i32 = arith.constant 0 : i32
    %c0_i32_0 = arith.constant 0 : i32
    %c0_i32_1 = arith.constant 0 : i32
    return %c0_i32, %c0_i32_0 : i32, i32
  }
  func.func @transform_1(%arg0: i32) -> (i32, i32) {
    %c0_i32 = arith.constant 0 : i32
    %c0_i32_0 = arith.constant 0 : i32
    return %arg0, %c0_i32 : i32, i32
  }
  func.func @transform_2(%arg0: i32) -> i32 {
    %c0_i32 = arith.constant 0 : i32
    %c0_i32_0 = arith.constant 0 : i32
    return %c0_i32 : i32
  }
}

</mosaic_0001>

<llo_original>
// kernel: tpu_custom_call.1
$region0: #{tpu_custom_call.1}
  #allocation0 [shape = 'u32[]', space=smem, size = 0x4, offset = 0x4, fixed_abs, tag = 'smem constant byte address 0x4 - core index']
  #allocation1 [shape = 'u32[144,128]{1,0:T(1,128)}', space=vmem, size = 0x12000, scoped, tag = 'internal scratch']
  #allocation2 [shape = 'f32[8,1]{1,0:T(8,128)}', space=vmem, size = 0x1000, scoped, tag = 'scratch operand']
  #allocation3 [shape = 'f32[8,1]{1,0:T(8,128)}', space=vmem, size = 0x1000, scoped, tag = 'scratch operand']
  #allocation4 [shape = 'f32[8,1]{1,0:T(8,128)}', space=vmem, size = 0x1000, scoped, tag = 'scratch operand']
  #allocation5 [shape = 'f32[8,1]{1,0:T(8,128)}', space=vmem, size = 0x1000, scoped, tag = 'scratch operand']
  #allocation6 [shape = 'f32[8,1]{1,0:T(8,128)}', space=vmem, size = 0x1000, scoped, tag = 'scratch operand']
  %s0 = inlined_call_operand.hbm [shape: f32[16,128], index: 0, kind: input, shape index: {}]
  %s1 = inlined_call_operand.hbm [shape: f32[8,128], index: 1, kind: input, shape index: {}]
  %s2 = inlined_call_operand.hbm [shape: f32[1], index: 2, kind: output, shape index: {}]
  %s3 = sld [smem:[#allocation0]]
  $region34: #{tpu_custom_call.1} parent=0
    _
  %s5 = ssub.s32 1, %s3
  %s6 = scalar_select 0, %s5, %s3
  $region1: #{tpu_custom_call.1} parent=0
    #allocation7 [shape = 'u8[8192]{0}', space=vmem, size = 0x2000, scoped, tag = 'input window, operand 0, single buffered']
    #allocation8 [shape = 's32[1]{0}', space=sflag, size = 0x4, scoped, tag = 'scoped memory for tpu_custom_call.1']
    #allocation9 [shape = 's32[1]{0}', space=sflag, size = 0x4, scoped, tag = 'scoped memory for tpu_custom_call.1']
    #allocation10 [shape = 'u8[4096]{0}', space=vmem, size = 0x1000, scoped, tag = 'input window, operand 1, single buffered']
    #allocation11 [shape = 's32[1]{0}', space=sflag, size = 0x4, scoped, tag = 'scoped memory for tpu_custom_call.1']
    #allocation12 [shape = 'u8[512]{0}', space=smem, size = 0x200, scoped, tag = 'output window, operand 0, single buffered']
    %7 = vsyncpa [#allocation8], 0
    %8 = vsyncpa [#allocation11], 0
    %9 = vsyncpa [#allocation9], 0
    // Predicated region
    $region2: #{tpu_custom_call.1} parent=1 // pred_check
      _
    $region3: #{tpu_custom_call.1} parent=1 // pred_check_branch
      %11 = sbr.rel (0) target = $region5
    $region4: #{tpu_custom_call.1} parent=1 // pred_region
      %s13 = ssub.s32 256, 256
      %14 = vsyncadd [#allocation8], %s13
      %s15 = sshll.u32 [#allocation7], 4
      %s16 = int_to_ptr.vmem [resolvable:$true] %s15
      %21 = dma.hbm_to_vmem [thread:$0]  %s0, 256, %s16, [#allocation8], 128, 128, 8
    $region5: #{tpu_custom_call.1} parent=1 // pred_fallthru
      _
    // Predicated region
    $region6: #{tpu_custom_call.1} parent=1 // pred_check
      _
    $region7: #{tpu_custom_call.1} parent=1 // pred_check_branch
      %23 = sbr.rel (0) target = $region9
    $region8: #{tpu_custom_call.1} parent=1 // pred_region
      %s25 = ssub.s32 128, 128
      %26 = vsyncadd [#allocation11], %s25
      %s28 = sshll.u32 [#allocation10], 4
      %s29 = int_to_ptr.vmem [resolvable:$true] %s28
      %31 = dma.hbm_to_vmem [thread:$0]  %s1, 128, %s29, [#allocation11]
    $region9: #{tpu_custom_call.1} parent=1 // pred_fallthru
      _
    // Predicated region
    $region10: #{tpu_custom_call.1} parent=1 // pred_check
      _
    $region11: #{tpu_custom_call.1} parent=1 // pred_check_branch
      %33 = sbr.rel (0) target = $region13
    $region12: #{tpu_custom_call.1} parent=1 // pred_region
      %34 = dma.done [#allocation8], 256
    $region13: #{tpu_custom_call.1} parent=1 // pred_fallthru
      _
    // Predicated region
    $region14: #{tpu_custom_call.1} parent=1 // pred_check
      _
    $region15: #{tpu_custom_call.1} parent=1 // pred_check_branch
      %36 = sbr.rel (0) target = $region17
    $region16: #{tpu_custom_call.1} parent=1 // pred_region
      %37 = dma.done [#allocation11], 128
    $region17: #{tpu_custom_call.1} parent=1 // pred_fallthru
      _
    %p38 = scmp.eq.s32.totalorder 0, 0
    // Predicated region
    $region18: #{tpu_custom_call.1} parent=1 // pred_check
      %p39 = pneg %p38
    $region19: #{tpu_custom_call.1} parent=1 // pred_check_branch
      %41 = sbr.rel (%p39) target = $region21
    $region20: #{tpu_custom_call.1} parent=1 // pred_region
      %s42 = scalar_lea.smem [#allocation12], 0
      %43 = sst [smem:[%s42]] 0.0
      %vm44 = vcmask 7168
      %45 = vst.msk [vmem:[#allocation2] sm:$0xff] %vm44, -inf
      %46 = vst.msk [vmem:[#allocation4] sm:$0xff] %vm44, -inf
      %47 = vst.msk [vmem:[#allocation3] sm:$0xff] %vm44, 0.0
      %48 = vst.msk [vmem:[#allocation5] sm:$0xff] %vm44, 0.0
      %49 = vst.msk [vmem:[#allocation6] sm:$0xff] %vm44, 0.0
    $region21: #{tpu_custom_call.1} parent=1 // pred_fallthru
      _
    %v50 = vld [vmem:[#allocation7] sm:$0xff]
    %v51 = vld [vmem:[#allocation7 + $0x8] sm:$0xff]
    %v52 = vld [vmem:[#allocation10] sm:$0xff]
    %53 = vmatprep.subr.mxu0 0.0
    %54 = vmatpush1.xpose.msra.mxu0 %v52
    %55 = vmatprep.subr.mxu0 0.0
    %56 = vmatpush1.xpose.msra.mxu0 0.0
    %57 = vmatprep.subr.mxu0 0.0
    %58 = vmatpush1.xpose.msra.mxu0 0.0
    %59 = vmatprep.subr.mxu0 0.0
    %60 = vmatpush1.xpose.msra.mxu0 0.0
    %61 = vmatprep.subr.mxu0 0.0
    %62 = vmatpush1.xpose.msra.mxu0 0.0
    %63 = vmatprep.subr.mxu0 0.0
    %64 = vmatpush1.xpose.msra.mxu0 0.0
    %65 = vmatprep.subr.mxu0 0.0
    %66 = vmatpush1.xpose.msra.mxu0 0.0
    %67 = vmatprep.subr.mxu0 0.0
    %68 = vmatpush1.xpose.msra.mxu0 0.0
    %69 = vmatprep.subr.mxu0 0.0
    %70 = vmatpush1.xpose.msra.mxu0 0.0
    %71 = vmatprep.subr.mxu0 0.0
    %72 = vmatpush1.xpose.msra.mxu0 0.0
    %73 = vmatprep.subr.mxu0 0.0
    %74 = vmatpush1.xpose.msra.mxu0 0.0
    %75 = vmatprep.subr.mxu0 0.0
    %76 = vmatpush1.xpose.msra.mxu0 0.0
    %77 = vmatprep.subr.mxu0 0.0
    %78 = vmatpush1.xpose.msra.mxu0 0.0
    %79 = vmatprep.subr.mxu0 0.0
    %80 = vmatpush1.xpose.msra.mxu0 0.0
    %81 = vmatprep.subr.mxu0 0.0
    %82 = vmatpush1.xpose.msra.mxu0 0.0
    %83 = vmatprep.subr.mxu0 0.0
    %84 = vmatpush1.xpose.msra.mxu0 0.0
    %85 = vmatprep.subr.mxu0 0.0
    %86 = vmatpush1.xpose.msra.mxu0 0.0
    %87 = vmatprep.subr.mxu0 0.0
    %88 = vmatpush1.xpose.msra.mxu0 0.0
    %89 = vmatprep.subr.mxu0 0.0
    %90 = vmatpush1.xpose.msra.mxu0 0.0
    %91 = vmatprep.subr.mxu0 0.0
    %92 = vmatpush1.xpose.msra.mxu0 0.0
    %93 = vmatprep.subr.mxu0 0.0
    %94 = vmatpush1.xpose.msra.mxu0 0.0
    %95 = vmatprep.subr.mxu0 0.0
    %96 = vmatpush1.xpose.msra.mxu0 0.0
    %97 = vmatprep.subr.mxu0 0.0
    %98 = vmatpush1.xpose.msra.mxu0 0.0
    %99 = vmatprep.subr.mxu0 0.0
    %100 = vmatpush1.xpose.msra.mxu0 0.0
    %101 = vmatprep.subr.mxu0 0.0
    %102 = vmatpush1.xpose.msra.mxu0 0.0
    %103 = vmatprep.subr.mxu0 0.0
    %104 = vmatpush1.xpose.msra.mxu0 0.0
    %105 = vmatprep.subr.mxu0 0.0
    %106 = vmatpush1.xpose.msra.mxu0 0.0
    %107 = vmatprep.subr.mxu0 0.0
    %108 = vmatpush1.xpose.msra.mxu0 0.0
    %109 = vmatprep.subr.mxu0 0.0
    %110 = vmatpush1.xpose.msra.mxu0 0.0
    %111 = vmatprep.subr.mxu0 0.0
    %112 = vmatpush1.xpose.msra.mxu0 0.0
    %113 = vmatprep.subr.mxu0 0.0
    %114 = vmatpush1.xpose.msra.mxu0 0.0
    %115 = vmatprep.subr.mxu0 0.0
    %116 = vmatpush1.xpose.msra.mxu0 0.0
    %117 = vmatprep.mubr.f32.mxu0 0.0
    %118 = vmatmul.mubr.f32.gmra.mrb[0].mxu0 %v50
    %v119 = vpop.f32.mrb[0].mxu0
    %v120 = vadd.f32 0.0, %v119
    %v121 = vpop.f32.mrb[0].mxu0
    %122 = vmatprep.mubr.f32.mxu0 0.0
    %123 = vmatmul.mubr.f32.gmra.mrb[0].mxu0 %v51
    %v124 = vpop.f32.mrb[0].mxu0
    %v125 = vadd.f32 0.0, %v124
    %v126 = vpop.f32.mrb[0].mxu0
    %127 = vdwg.mxu0
    %v128 = vmul.f32 %v120, 14.285714
    %v129 = vmul.f32 %v125, 14.285714
    %v130 = vld [vmem:[#allocation2] sm:$0xff]
    %vm131 = vcmask 64512
    %v132 = vsel %vm131, %v128, -inf
    %133 = vmax.xlane.f32.xlu0 %v132
    %v134 = vpop.xlane.xlu0 %133
    %v135 = vmax.f32 %v130, %v134
    %v136 = vld [vmem:[#allocation3] sm:$0xff]
    %v137 = vsub.f32 %v130, %v135
    %v138 = vmul.f32 %v137, 1.442695
    %v139 = vpow.pop %v138
    %v140 = vmul.f32 %v136, %v139
    %142 = vset.pattern.permute.xlu0 0
    %143 = vperm.xlu0 %142, %v135
    %v144 = vpop.permute.xlu0 %143
    %v146 = vsub.f32 %v128, %v144
    %v147 = vmul.f32 %v146, 1.442695
    %v148 = vpow.pop %v147
    %v149 = vsel %vm131, %v148, 0.0
    %150 = vadd.xlane.f32.xlu0 %v149
    %v151 = vpop.xlane.xlu0 %150
    %v152 = vadd.f32 %v140, %v151
    %vm153 = vcmask 7168
    %154 = vst.msk [vmem:[#allocation3] sm:$0xff] %vm153, %v152
    %155 = vst.msk [vmem:[#allocation2] sm:$0xff] %vm153, %v135
    %v156 = vld [vmem:[#allocation4] sm:$0xff]
    %v157 = vsel %vm131, %v129, -inf
    %158 = vmax.xlane.f32.xlu0 %v157
    %v159 = vpop.xlane.xlu0 %158
    %v160 = vmax.f32 %v156, %v159
    %v161 = vsub.f32 %v156, %v160
    %v162 = vmul.f32 %v161, 1.442695
    %v163 = vpow.pop %v162
    %165 = vset.pattern.permute.xlu0 0
    %166 = vperm.xlu0 %165, %v160
    %v167 = vpop.permute.xlu0 %166
    %v169 = vsub.f32 %v129, %v167
    %v170 = vmul.f32 %v169, 1.442695
    %v171 = vpow.pop %v170
    %v172 = vld [vmem:[#allocation5] sm:$0xff]
    %v173 = vmul.f32 %v172, %v163
    %v174 = vsel %vm131, %v171, 0.0
    %175 = vadd.xlane.f32.xlu0 %v174
    %v176 = vpop.xlane.xlu0 %175
    %v177 = vadd.f32 %v173, %v176
    %178 = vst.msk [vmem:[#allocation5] sm:$0xff] %vm153, %v177
    %v179 = vld [vmem:[#allocation6] sm:$0xff]
    %v180 = vmul.f32 %v179, %v163
    %v181 = vsub.f32 %v129, %v128
    %v182 = vmul.f32 %v171, %v181
    %v183 = vsel %vm131, %v182, 0.0
    %184 = vadd.xlane.f32.xlu0 %v183
    %v185 = vpop.xlane.xlu0 %184
    %v186 = vadd.f32 %v180, %v185
    %187 = vst.msk [vmem:[#allocation6] sm:$0xff] %vm153, %v186
    %188 = vst.msk [vmem:[#allocation4] sm:$0xff] %vm153, %v160
    // Predicated region
    $region22: #{tpu_custom_call.1} parent=1 // pred_check
      %p189 = pneg %p38
    $region23: #{tpu_custom_call.1} parent=1 // pred_check_branch
      %191 = sbr.rel (%p189) target = $region25
    $region24: #{tpu_custom_call.1} parent=1 // pred_region
      %v192 = vld [vmem:[#allocation5] sm:$0xff]
      %v193 = vrcp.pop %v192
      %v194 = vld [vmem:[#allocation6] sm:$0xff]
      %v195 = vmul.f32 %v194, %v193
      %v196 = vld [vmem:[#allocation4] sm:$0xff]
      %v197 = vlog2.pop %v192
      %v198 = vmul.f32 %v197, 0.6931472
      %v199 = vadd.f32 %v196, %v198
      %v200 = vsub.f32 %v195, %v199
      %v201 = vld [vmem:[#allocation2] sm:$0xff]
      %v202 = vld [vmem:[#allocation3] sm:$0xff]
      %v203 = vlog2.pop %v202
      %v204 = vmul.f32 %v203, 0.6931472
      %v205 = vadd.f32 %v201, %v204
      %v206 = vadd.f32 %v200, %v205
      %v207 = vsel %vm153, %v206, 0.0
      %208 = vadd.xlane.f32.xlu0 %v207
      %v209 = vpop.xlane.xlu0 %208
      %v210 = vrot.slane %v209, 4
      %v211 = vadd.f32 %v209, %v210
      %v212 = vrot.slane %v211, 2
      %v213 = vadd.f32 %v211, %v212
      %v214 = vrot.slane %v213, 1
      %v215 = vadd.f32 %v213, %v214
      %s216 = vtos %v215
      %v217 = vrcp.pop 8.0
      %s218 = vtos %v217
      %s219 = smul.f32 %s216, %s218
      %s220 = scalar_lea.smem [#allocation12], 0
      %221 = sst [smem:[%s220]] %s219
    $region25: #{tpu_custom_call.1} parent=1 // pred_fallthru
      _
    // Predicated region
    $region26: #{tpu_custom_call.1} parent=1 // pred_check
      _
    $region27: #{tpu_custom_call.1} parent=1 // pred_check_branch
      %223 = sbr.rel (0) target = $region29
    $region28: #{tpu_custom_call.1} parent=1 // pred_region
      %s225 = ssub.s32 16, 16
      %226 = vsyncadd [#allocation9], %s225
      %229 = dma.smem_to_hbm [#allocation12], 16, %s2, [#allocation9]
    $region29: #{tpu_custom_call.1} parent=1 // pred_fallthru
      _
    // Predicated region
    $region30: #{tpu_custom_call.1} parent=1 // pred_check
      _
    $region31: #{tpu_custom_call.1} parent=1 // pred_check_branch
      %231 = sbr.rel (0) target = $region33
    $region32: #{tpu_custom_call.1} parent=1 // pred_region
      %232 = dma.done [#allocation9], 16
    $region33: #{tpu_custom_call.1} parent=1 // pred_fallthru
      _
    %233 = sfence
    %234 = vsyncpa [#allocation8], 1
    %235 = vsyncpa [#allocation11], 1
    %236 = vsyncpa [#allocation9], 1

</llo_original>
